<compile_context>
chip_gen: v7x
topology: tpu7x:2x2x1
jax: 0.10.0
libtpu: 0.0.40
codegen_flags: <defaults>
</compile_context>

<pallas_src>
import functools

import jax
import jax.numpy as jnp
from jax.experimental import pallas as pl
from jax.experimental.pallas import tpu as pltpu

EPS = 1e-6          # matches torch.nn.functional.pairwise_distance default eps
_LANE = 128
_SUBLANE = 8


def _round_up(x, m):
    return (x + m - 1) // m * m


def _contrastive_loss_kernel(o1_ref, o2_ref, lab_ref, out_ref, *,
                             margin, d_valid, b_valid, tile_b):
    i = pl.program_id(0)

    # Widen to f32 in-register (inputs may be bf16; HBM traffic stays narrow).
    o1 = o1_ref[...].astype(jnp.float32)                      # (TILE_B, D_pad)
    o2 = o2_ref[...].astype(jnp.float32)

    # torch: diff = x1 - x2 + eps, distance = ||diff||_2 over the TRUE feature dim.
    diff = o1 - o2 + jnp.float32(EPS)
    lane_ids = jax.lax.broadcasted_iota(jnp.int32, diff.shape, 1)
    diff = jnp.where(lane_ids < d_valid, diff, 0.0)           # zero padded feature lanes

    sq_sum = jnp.sum(diff * diff, axis=-1, keepdims=True)     # (TILE_B, 1) == d^2
    dist = jnp.sqrt(sq_sum)                                   # EUP sqrt

    label = lab_ref[...].astype(jnp.float32)                  # (TILE_B, 1)
    hinge = jnp.maximum(jnp.float32(margin) - dist, 0.0)
    # (1 - label) * d^2 + label * clamp(margin - d, 0)^2 ; use sq_sum for d^2.
    row_loss = (1.0 - label) * sq_sum + label * (hinge * hinge)

    # Mask rows that are pure batch padding (global row id >= true batch size).
    row_ids = i * tile_b + jax.lax.broadcasted_iota(jnp.int32, row_loss.shape, 0)
    row_loss = jnp.where(row_ids < b_valid, row_loss, 0.0)

    partial = jnp.sum(row_loss)
    # Lane-dense (1, 1, 128) store of this tile's partial sum (wrapper reads lane 0).
    out_ref[...] = jnp.broadcast_to(partial, out_ref.shape).astype(jnp.float32)


def contrastive_loss(output1, output2, label, margin=2.0):
    """output1, output2: (B, D) float; label: (B,) or (B, 1). Returns scalar f32 loss."""
    B, D = output1.shape
    assert output2.shape == (B, D)
    label = jnp.reshape(label, (B, 1)).astype(jnp.float32)

    # Lane-dense feature dim.
    d_pad = _round_up(D, _LANE)

    # Row tile: keep 2 inputs x 2 pipeline buffers well under the v7x scoped-VMEM
    # budget (v7x has only 64 MiB physical / 32 MiB default scoped).
    vmem_budget = 24 * 1024 * 1024
    bytes_per_row = 2 * 2 * d_pad * 4                      # 2 inputs, double-buffered, <=f32
    tile_cap = max(_SUBLANE, (vmem_budget // bytes_per_row) // _SUBLANE * _SUBLANE)
    tile_b = int(min(_round_up(B, _SUBLANE), tile_cap, 1024))
    b_pad = _round_up(B, tile_b)
    num_tiles = b_pad // tile_b

    # Zero-pad rows/lanes (padding is masked out inside the kernel). No dtype up-cast.
    o1p = jnp.pad(output1, ((0, b_pad - B), (0, d_pad - D)))
    o2p = jnp.pad(output2, ((0, b_pad - B), (0, d_pad - D)))
    labp = jnp.pad(label, ((0, b_pad - B), (0, 0)))

    kernel = functools.partial(
        _contrastive_loss_kernel,
        margin=float(margin), d_valid=D, b_valid=B, tile_b=tile_b)

    partials = pl.pallas_call(
        kernel,
        out_shape=jax.ShapeDtypeStruct((num_tiles, 1, _LANE), jnp.float32),
        grid_spec=pl.GridSpec(
            grid=(num_tiles,),
            in_specs=[
                pl.BlockSpec((tile_b, d_pad), lambda i: (i, 0)),
                pl.BlockSpec((tile_b, d_pad), lambda i: (i, 0)),
                pl.BlockSpec((tile_b, 1), lambda i: (i, 0)),
            ],
            out_specs=pl.BlockSpec((1, 1, _LANE), lambda i: (i, 0, 0)),
        ),
        compiler_params=pltpu.CompilerParams(
            dimension_semantics=("parallel",),   # batch tiles shard across v7x's 2 TCs
        ),
    )(o1p, o2p, labp)

    # Tiny final reduction over tiles + mean over the TRUE batch size.
    return jnp.sum(partials[:, 0, 0]) / jnp.float32(B)


def _reference_loss(output1, output2, label, margin=2.0):
    # Pure-JAX reference mirroring the PyTorch forward exactly.
    diff = output1.astype(jnp.float32) - output2.astype(jnp.float32) + EPS
    dist = jnp.sqrt(jnp.sum(diff * diff, axis=-1, keepdims=True))
    label = label.reshape(label.shape[0], 1).astype(jnp.float32)
    hinge = jnp.maximum(margin - dist, 0.0)
    loss = (1.0 - label) * dist ** 2 + label * hinge ** 2
    return jnp.mean(loss)


if __name__ == "__main__":
    key = jax.random.PRNGKey(0)
    k1, k2, k3 = jax.random.split(key, 3)

    B, D = 8, 32  # small embedding batch from the siamese network
    output1 = jax.random.normal(k1, (B, D), dtype=jnp.float32)
    output2 = jax.random.normal(k2, (B, D), dtype=jnp.float32)
    label = jax.random.bernoulli(k3, 0.5, (B, 1)).astype(jnp.float32)

    loss = contrastive_loss(output1, output2, label, margin=2.0)
    loss = jax.block_until_ready(loss)

    ref = _reference_loss(output1, output2, label, margin=2.0)
    assert jnp.allclose(loss, ref, rtol=1e-5, atol=1e-5), (loss, ref)

    print("KERNEL_OK")
</pallas_src>

<mosaic_0001>
module attributes {stable_mosaic.version = 11 : i64} {
  func.func @_contrastive_loss_kernel(%arg0: i32, %arg1: memref<8x128xf32, #tpu.memory_space<vmem>>, %arg2: memref<8x128xf32, #tpu.memory_space<vmem>>, %arg3: memref<8x1xf32, #tpu.memory_space<vmem>>, %arg4: memref<1x1x128xf32, #tpu.memory_space<vmem>>) attributes {dimension_semantics = [#tpu.dimension_semantics<parallel>], iteration_bounds = array<i64: 1>, scalar_prefetch = 0 : i64, scratch_operands = 0 : i64, tpu.core_type = #tpu.core_type<tc>, window_params = [{transform_indices = @transform_0, window_bounds = array<i64: 8, 128>}, {transform_indices = @transform_1, window_bounds = array<i64: 8, 128>}, {transform_indices = @transform_2, window_bounds = array<i64: 8, 1>}, {transform_indices = @transform_3, window_bounds = array<i64: 1, 1, 128>}]} {
    %c0 = arith.constant 0 : index
    %c0_0 = arith.constant 0 : index
    %0 = vector.load %arg1[%c0, %c0_0] : memref<8x128xf32, #tpu.memory_space<vmem>>, vector<8x128xf32>
    %c0_1 = arith.constant 0 : index
    %c0_2 = arith.constant 0 : index
    %1 = vector.load %arg2[%c0_1, %c0_2] : memref<8x128xf32, #tpu.memory_space<vmem>>, vector<8x128xf32>
    %2 = arith.subf %0, %1 : vector<8x128xf32>
    %cst = arith.constant 9.99999997E-7 : f32
    %3 = vector.broadcast %cst : f32 to vector<8x128xf32>
    %4 = arith.addf %2, %3 : vector<8x128xf32>
    %5 = tpu.iota {dimensions = array<i32: 1>} : vector<8x128xi32>
    %c32_i32 = arith.constant 32 : i32
    %6 = vector.broadcast %c32_i32 : i32 to vector<8x128xi32>
    %7 = arith.cmpi slt, %5, %6 : vector<8x128xi32>
    %cst_3 = arith.constant 0.000000e+00 : f32
    %8 = vector.broadcast %cst_3 : f32 to vector<8x128xf32>
    %9 = arith.select %7, %4, %8 : vector<8x128xi1>, vector<8x128xf32>
    %10 = arith.mulf %9, %9 : vector<8x128xf32>
    %cst_4 = arith.constant dense<0.000000e+00> : vector<8xf32>
    %11 = vector.multi_reduction <add>, %10, %cst_4 [1] : vector<8x128xf32> to vector<8xf32>
    %12 = vector.shape_cast %11 : vector<8xf32> to vector<8x1xf32>
    %13 = math.sqrt %12 : vector<8x1xf32>
    %c0_5 = arith.constant 0 : index
    %c0_6 = arith.constant 0 : index
    %14 = vector.load %arg3[%c0_5, %c0_6] : memref<8x1xf32, #tpu.memory_space<vmem>>, vector<8x1xf32>
    %cst_7 = arith.constant 2.000000e+00 : f32
    %15 = vector.broadcast %cst_7 : f32 to vector<8x1xf32>
    %16 = arith.subf %15, %13 : vector<8x1xf32>
    %cst_8 = arith.constant 0.000000e+00 : f32
    %17 = vector.broadcast %cst_8 : f32 to vector<8x1xf32>
    %18 = arith.maximumf %16, %17 : vector<8x1xf32>
    %cst_9 = arith.constant 1.000000e+00 : f32
    %19 = vector.broadcast %cst_9 : f32 to vector<8x1xf32>
    %20 = arith.subf %19, %14 : vector<8x1xf32>
    %21 = arith.mulf %20, %12 : vector<8x1xf32>
    %22 = arith.mulf %18, %18 : vector<8x1xf32>
    %23 = arith.mulf %14, %22 : vector<8x1xf32>
    %24 = arith.addf %21, %23 : vector<8x1xf32>
    %c8_i32 = arith.constant 8 : i32
    %25 = arith.muli %arg0, %c8_i32 : i32
    %26 = tpu.iota {dimensions = array<i32: 0>} : vector<8x1xi32>
    %27 = vector.broadcast %25 : i32 to vector<8x1xi32>
    %28 = arith.addi %27, %26 : vector<8x1xi32>
    %c8_i32_10 = arith.constant 8 : i32
    %29 = vector.broadcast %c8_i32_10 : i32 to vector<8x1xi32>
    %30 = arith.cmpi slt, %28, %29 : vector<8x1xi32>
    %cst_11 = arith.constant 0.000000e+00 : f32
    %31 = vector.broadcast %cst_11 : f32 to vector<8x1xf32>
    %32 = arith.select %30, %24, %31 : vector<8x1xi1>, vector<8x1xf32>
    %33 = vector.shape_cast %32 : vector<8x1xf32> to vector<1x8x1xf32>
    %cst_12 = arith.constant dense<0.000000e+00> : vector<1xf32>
    %34 = vector.multi_reduction <add>, %33, %cst_12 [1, 2] : vector<1x8x1xf32> to vector<1xf32>
    %35 = vector.shape_cast %34 : vector<1xf32> to vector<1x1x1xf32>
    %36 = vector.extract %35[0, 0, 0] : f32 from vector<1x1x1xf32>
    %37 = vector.broadcast %36 : f32 to vector<1x1x128xf32>
    %c0_13 = arith.constant 0 : index
    %c0_14 = arith.constant 0 : index
    %c0_15 = arith.constant 0 : index
    %38 = vector.load %arg4[%c0_13, %c0_14, %c0_15] : memref<1x1x128xf32, #tpu.memory_space<vmem>>, vector<1x1x128xf32>
    tpu.vector_store %arg4[%c0_13, %c0_14, %c0_15], %37 {strides = array<i32>} : memref<1x1x128xf32, #tpu.memory_space<vmem>>, vector<1x1x128xf32>,
    return
  }
  func.func @transform_0(%arg0: i32) -> (i32, i32) {
    %c0_i32 = arith.constant 0 : i32
    %c0_i32_0 = arith.constant 0 : i32
    return %arg0, %c0_i32 : i32, i32
  }
  func.func @transform_1(%arg0: i32) -> (i32, i32) {
    %c0_i32 = arith.constant 0 : i32
    %c0_i32_0 = arith.constant 0 : i32
    return %arg0, %c0_i32 : i32, i32
  }
  func.func @transform_2(%arg0: i32) -> (i32, i32) {
    %c0_i32 = arith.constant 0 : i32
    %c0_i32_0 = arith.constant 0 : i32
    return %arg0, %c0_i32 : i32, i32
  }
  func.func @transform_3(%arg0: i32) -> (i32, i32, i32) {
    %c0_i32 = arith.constant 0 : i32
    %c0_i32_0 = arith.constant 0 : i32
    %c0_i32_1 = arith.constant 0 : i32
    return %arg0, %c0_i32, %c0_i32_0 : i32, i32, i32
  }
}

</mosaic_0001>

<llo_original>
// kernel: tpu_custom_call.1
$region0: #{tpu_custom_call.1}
  #allocation0 [shape = 'u32[]', space=smem, size = 0x4, offset = 0x4, fixed_abs, tag = 'smem constant byte address 0x4 - core index']
  #allocation1 [shape = 'u32[144,128]{1,0:T(1,128)}', space=vmem, size = 0x12000, scoped, tag = 'internal scratch']
  %s0 = inlined_call_operand.vmem [shape: f32[8,128], index: 0, kind: input, shape index: {}]
  %s1 = inlined_call_operand.hbm [shape: f32[8,128], index: 1, kind: input, shape index: {}]
  %s2 = inlined_call_operand.vmem [shape: f32[8,1], index: 2, kind: input, shape index: {}]
  %s3 = inlined_call_operand.hbm [shape: f32[1,1,128], index: 3, kind: output, shape index: {}]
  %s4 = sld [smem:[#allocation0]]
  $region26: #{tpu_custom_call.1} parent=0
    _
  %s6 = ssub.s32 1, %s4
  %s7 = scalar_select 0, %s6, %s4
  $region1: #{tpu_custom_call.1} parent=0
    #allocation2 [shape = 'u8[4096]{0}', space=vmem, size = 0x1000, scoped, tag = 'input window, operand 1, single buffered']
    #allocation3 [shape = 's32[1]{0}', space=sflag, size = 0x4, scoped, tag = 'scoped memory for tpu_custom_call.1']
    #allocation4 [shape = 's32[1]{0}', space=sflag, size = 0x4, scoped, tag = 'scoped memory for tpu_custom_call.1']
    #allocation5 [shape = 'u8[512]{0}', space=vmem, size = 0x400, scoped, tag = 'output window, operand 0, single buffered']
    %8 = vsyncpa [#allocation3], 0
    %9 = vsyncpa [#allocation4], 0
    // Predicated region
    $region2: #{tpu_custom_call.1} parent=1 // pred_check
      _
    $region3: #{tpu_custom_call.1} parent=1 // pred_check_branch
      %11 = sbr.rel (0) target = $region5
    $region4: #{tpu_custom_call.1} parent=1 // pred_region
      _
    $region5: #{tpu_custom_call.1} parent=1 // pred_fallthru
      _
    // Predicated region
    $region6: #{tpu_custom_call.1} parent=1 // pred_check
      _
    $region7: #{tpu_custom_call.1} parent=1 // pred_check_branch
      %13 = sbr.rel (0) target = $region9
    $region8: #{tpu_custom_call.1} parent=1 // pred_region
      %s15 = ssub.s32 128, 128
      %16 = vsyncadd [#allocation3], %s15
      %s18 = sshll.u32 [#allocation2], 4
      %s19 = int_to_ptr.vmem [resolvable:$true] %s18
      %21 = dma.hbm_to_vmem [thread:$0]  %s1, 128, %s19, [#allocation3]
    $region9: #{tpu_custom_call.1} parent=1 // pred_fallthru
      _
    // Predicated region
    $region10: #{tpu_custom_call.1} parent=1 // pred_check
      _
    $region11: #{tpu_custom_call.1} parent=1 // pred_check_branch
      %23 = sbr.rel (0) target = $region13
    $region12: #{tpu_custom_call.1} parent=1 // pred_region
      _
    $region13: #{tpu_custom_call.1} parent=1 // pred_fallthru
      _
    // Predicated region
    $region14: #{tpu_custom_call.1} parent=1 // pred_check
      _
    $region15: #{tpu_custom_call.1} parent=1 // pred_check_branch
      %25 = sbr.rel (0) target = $region17
    $region16: #{tpu_custom_call.1} parent=1 // pred_region
      %26 = dma.done [#allocation3], 128
    $region17: #{tpu_custom_call.1} parent=1 // pred_fallthru
      _
    %v27 = vld [vmem:[%s0] sm:$0xff]
    %v28 = vld [vmem:[#allocation2] sm:$0xff]
    %v29 = vsub.f32 %v27, %v28
    %v30 = vadd.f32 %v29, 1e-06
    %v31 = vlaneseq
    %v32 = vand.u32 %v31, 127
    %vm33 = vcmp.lt.s32.totalorder %v32, 32
    %v34 = vsel %vm33, %v30, 0.0
    %v35 = vmul.f32 %v34, %v34
    %36 = vadd.xlane.f32.xlu0 %v35
    %v37 = vpop.xlane.xlu0 %36
    %v38 = vrsqrt.pop %v37
    %v39 = vmul.f32 %v37, %v38
    %vm40 = vcmp.eq.f32.partialorder %v37, inf
    %v41 = vsel %vm40, %v37, %v39
    %vm42 = vcmp.eq.f32.partialorder %v37, 0.0
    %v43 = vand.u32 %v37, 2147483648
    %v44 = vsel %vm42, %v43, %v41
    %v45 = vld [vmem:[%s2] sm:$0xff]
    %v46 = vsub.f32 2.0, %v44
    %v47 = vmax.f32 %v46, 0.0
    %v48 = vsub.f32 1.0, %v45
    %v49 = vmul.f32 %v48, %v37
    %v50 = vmul.f32 %v47, %v47
    %v51 = vmul.f32 %v45, %v50
    %v52 = vadd.f32 %v49, %v51
    %s53 = smul.u32 0, 8
    %v54 = vlaneseq
    %v55 = vshrl.u32 %v54, 7
    %v56 = vstv %s53
    %v57 = vadd.s32 %v56, %v55
    %vm58 = vcmp.lt.s32.totalorder %v57, 8
    %v59 = vsel %vm58, %v52, 0.0
    %vm60 = vcmask 7168
    %v61 = vsel %vm60, %v59, 0.0
    %62 = vadd.xlane.f32.xlu0 %v61
    %v63 = vpop.xlane.xlu0 %62
    %v64 = vrot.slane %v63, 4
    %v65 = vadd.f32 %v63, %v64
    %v66 = vrot.slane %v65, 2
    %v67 = vadd.f32 %v65, %v66
    %v68 = vrot.slane %v67, 1
    %v69 = vadd.f32 %v67, %v68
    %s70 = vtos %v69
    %v71 = vstv %s70
    %72 = vst [vmem:[#allocation5] sm:$0x1] %v71
    // Predicated region
    $region18: #{tpu_custom_call.1} parent=1 // pred_check
      _
    $region19: #{tpu_custom_call.1} parent=1 // pred_check_branch
      %74 = sbr.rel (0) target = $region21
    $region20: #{tpu_custom_call.1} parent=1 // pred_region
      %s76 = ssub.s32 16, 16
      %77 = vsyncadd [#allocation4], %s76
      %s79 = sshll.u32 [#allocation5], 4
      %s80 = int_to_ptr.vmem [resolvable:$true] %s79
      %82 = dma.vmem_to_hbm [thread:$0]  %s80, 16, %s3, [#allocation4]
    $region21: #{tpu_custom_call.1} parent=1 // pred_fallthru
      _
    // Predicated region
    $region22: #{tpu_custom_call.1} parent=1 // pred_check
      _
    $region23: #{tpu_custom_call.1} parent=1 // pred_check_branch
      %84 = sbr.rel (0) target = $region25
    $region24: #{tpu_custom_call.1} parent=1 // pred_region
      %85 = dma.done [#allocation4], 16
    $region25: #{tpu_custom_call.1} parent=1 // pred_fallthru
      _
    %86 = vsyncpa [#allocation3], 1
    %87 = vsyncpa [#allocation4], 1

</llo_original>
